<compile_context>
chip_gen: v7x
topology: tpu7x:2x2x1
jax: 0.10.0
libtpu: 0.0.40
codegen_flags: <defaults>
</compile_context>

<pallas_src>
import functools
import math

import jax
import jax.numpy as jnp
import numpy as np
from jax.experimental import pallas as pl
from jax.experimental.pallas import tpu as pltpu

LN_EPS = 1e-5  # nn.LayerNorm default eps (only used by the pure-JAX reference)


# --------------------------------------------------------------------------- utils
def _round_up(v: int, m: int) -> int:
    return -(-v // m) * m


def _tpu_vmem_cap_bytes() -> int:
    """Generation-aware scoped-VMEM cap: physical capacity minus compiler headroom."""
    try:
        cap = int(pltpu.get_tpu_info().vmem_capacity_bytes)   # 128 MiB v5e/v6e, 64 MiB v7x
    except Exception:
        cap = 64 << 20                                         # conservative (v7x-sized)
    return max(24 << 20, cap - (12 << 20))


def _pick_hw_tiling(C: int, HW: int, cap_bytes: int):
    """Lane-aligned HW tile so the streamed f32 blocks (3 input bufs + 2 output bufs
    + ~2 blocks of temporaries) stay within a budget well under the scoped cap."""
    budget = min(48 << 20, cap_bytes // 2)
    per_lane = 7 * C * 4
    hw128 = _round_up(HW, 128)
    max_tile = max(128, (budget // per_lane) // 128 * 128)
    n_tiles = -(-hw128 // max_tile)
    tile = _round_up(-(-hw128 // n_tiles), 128)   # minimizes padding waste
    return tile, tile * n_tiles, n_tiles


def _vmem_limit_bytes(C: int, Cm: int, tile: int, cap_bytes: int) -> int:
    """Exact-ish per-call estimate (streamed bufs + (Cm,tile) temporaries + weights)
    plus slack, floored at 32 MiB and capped by the generation-aware limit."""
    blk = C * tile * 4
    need = 7 * blk + 4 * Cm * tile * 4 + 4 * Cm * C * 4 + (8 << 20)
    return int(min(cap_bytes, max(need, 32 << 20)))


# ------------------------------------------------------------------------- kernels
def _psa_stats_kernel(x_ref,      # (1, C, tile)
                      wq_ref,     # (Cm, C)   wq_sp
                      bq_ref,     # (Cm, 1)   bq_sp
                      wv_ref,     # (Cm, C)   wv_sp
                      bv_ref,     # (Cm, 1)   bv_sp
                      wrow_ref,   # out (1, 1, C)
                      bsp_ref,    # out (1, 1, 1)
                      mx_ref,     # scratch (Cm, 1) running max
                      *, hw_real, tile, padded):
    """Per image: running max over HW tiles of wq_sp@x + bq_sp; on the last tile,
    softmax over Cm and the fused spatial row weight/bias (sm^T wv_sp, sm^T bv_sp)."""
    t = pl.program_id(1)
    x = x_ref[0]                                                        # (C, tile)
    logits = (jnp.dot(wq_ref[...], x, preferred_element_type=jnp.float32)
              + bq_ref[...])                                            # (Cm, tile)
    if padded:
        # Mask lanes beyond the real HW so zero-padding cannot perturb the max.
        col = t * tile + jax.lax.broadcasted_iota(jnp.int32, logits.shape, 1)
        logits = jnp.where(col < hw_real, logits, -jnp.inf)
    tile_max = jnp.max(logits, axis=-1, keepdims=True)                  # (Cm, 1)

    @pl.when(t == 0)
    def _():
        mx_ref[...] = tile_max

    @pl.when(t > 0)
    def _():
        mx_ref[...] = jnp.maximum(mx_ref[...], tile_max)

    @pl.when(t == pl.num_programs(1) - 1)
    def _():
        m = mx_ref[...]                                                 # (Cm, 1)
        m0 = jnp.max(m, axis=0, keepdims=True)
        e = jnp.exp(m - m0)
        sm = e / jnp.sum(e, axis=0, keepdims=True)                      # softmax over Cm
        # sm^T @ (wv_sp @ x + bv_sp) == (sm^T wv_sp) @ x + sm^T bv_sp
        wrow_ref[0] = jnp.sum(sm * wv_ref[...], axis=0, keepdims=True)  # (1, C)
        bsp_ref[0] = jnp.sum(sm * bv_ref[...], axis=0, keepdims=True)   # (1, 1)


def _psa_stream_kernel(x_ref,      # (1, C, tile)
                       wrow_ref,   # (1, 1, C)
                       bsp_ref,    # (1, 1, 1)
                       scalars_ref,  # SMEM (1,): sigmoid(ln_beta) -- folded channel gate
                       o_ref):     # (1, C, tile)
    """Per (image, HW tile): out = x * (sigmoid(w_row @ x + b_sp) + sigmoid(ln_beta))."""
    x = x_ref[0]                                                        # (C, tile)
    s = (jnp.dot(wrow_ref[0], x, preferred_element_type=jnp.float32)
         + bsp_ref[0])                                                  # (1, tile)
    o_ref[0] = x * (jax.nn.sigmoid(s) + scalars_ref[0])


# ------------------------------------------------------------------------- wrapper
def psa_forward(x_nchw, params):
    """x_nchw: (B, C, H, W) float32. params: dict of weights (see init_params)."""
    B, C, H, W = x_nchw.shape
    HW = H * W
    Cm = params["wq_sp"].shape[0]

    cap = _tpu_vmem_cap_bytes()
    tile, hw_pad, n_t = _pick_hw_tiling(C, HW, cap)
    vmem_limit = _vmem_limit_bytes(C, Cm, tile, cap)
    padded = hw_pad != HW

    x = x_nchw.reshape(B, C, HW).astype(jnp.float32)
    if padded:
        x = jnp.pad(x, ((0, 0), (0, 0), (0, hw_pad - HW)))

    # Channel-branch fold: LayerNorm over a size-1 last dim returns beta exactly, so
    # PSAChannel's gate is the input-independent constant sigmoid(ln_beta).
    ch_const = jax.nn.sigmoid(params["ln_beta"].astype(jnp.float32)).reshape(1)

    def const_spec(shape):
        return pl.BlockSpec(shape, lambda b, t: (0,) * len(shape))

    # ---- Stage 1: per-image spatial-attention statistics ----
    w_row, b_sp = pl.pallas_call(
        functools.partial(_psa_stats_kernel, hw_real=HW, tile=tile, padded=padded),
        out_shape=(jax.ShapeDtypeStruct((B, 1, C), jnp.float32),
                   jax.ShapeDtypeStruct((B, 1, 1), jnp.float32)),
        grid_spec=pltpu.PrefetchScalarGridSpec(
            num_scalar_prefetch=0,
            grid=(B, n_t),
            in_specs=[
                pl.BlockSpec((1, C, tile), lambda b, t: (b, 0, t)),   # x tile
                const_spec((Cm, C)),                                  # wq_sp
                const_spec((Cm, 1)),                                  # bq_sp
                const_spec((Cm, C)),                                  # wv_sp
                const_spec((Cm, 1)),                                  # bv_sp
            ],
            out_specs=(pl.BlockSpec((1, 1, C), lambda b, t: (b, 0, 0)),
                       pl.BlockSpec((1, 1, 1), lambda b, t: (b, 0, 0))),
            scratch_shapes=[pltpu.VMEM((Cm, 1), jnp.float32)],
        ),
        compiler_params=pltpu.CompilerParams(
            dimension_semantics=("parallel", "arbitrary"),
            vmem_limit_bytes=vmem_limit),
    )(x, params["wq_sp"], params["bq_sp"], params["wv_sp"], params["bv_sp"])

    # ---- Stage 2: stream x, apply fused spatial gate + folded channel constant ----
    x_spec = pl.BlockSpec((1, C, tile), lambda b, t: (b, 0, t))
    if n_t >= 3:
        # Triple-buffer the streamed x tile when HW is actually tiled.
        x_spec = pl.BlockSpec((1, C, tile), lambda b, t: (b, 0, t),
                              pipeline_mode=pl.Buffered(3))

    out = pl.pallas_call(
        _psa_stream_kernel,
        out_shape=jax.ShapeDtypeStruct((B, C, hw_pad), jnp.float32),
        grid_spec=pltpu.PrefetchScalarGridSpec(
            num_scalar_prefetch=0,
            grid=(B, n_t),
            in_specs=[
                x_spec,                                               # x tile
                pl.BlockSpec((1, 1, C), lambda b, t: (b, 0, 0)),      # w_row
                pl.BlockSpec((1, 1, 1), lambda b, t: (b, 0, 0)),      # b_sp
                pl.BlockSpec(memory_space=pltpu.MemorySpace.SMEM),    # sigmoid(ln_beta)
            ],
            out_specs=pl.BlockSpec((1, C, tile), lambda b, t: (b, 0, t)),
        ),
        compiler_params=pltpu.CompilerParams(
            dimension_semantics=("parallel", "parallel"),
            vmem_limit_bytes=vmem_limit),
    )(x, w_row, b_sp, ch_const)

    if padded:
        out = out[:, :, :HW]
    return out.reshape(B, C, H, W)


# ----------------------------------------------------------------------- reference
def psa_reference(x_nchw, params):
    """Pure-JAX reference of PSA (parallel mode), mirroring the PyTorch module."""
    B, C, H, W = x_nchw.shape
    HW = H * W
    xf = x_nchw.reshape(B, C, HW)

    # channel branch (full module, no folding)
    xv = jnp.einsum("oc,bcp->bop", params["wv_ch"], xf) + params["bv_ch"][None]
    q = jax.nn.softmax(
        jnp.einsum("oc,bcp->bop", params["wq_ch"], xf) + params["bq_ch"][None], axis=-1)
    x_attn = jnp.sum(xv * q, axis=-1, keepdims=True)                       # (B, Cm, 1)
    z = jnp.einsum("oc,bcp->bop", params["wz"], x_attn) + params["bz"][None]  # (B, C, 1)
    mean = jnp.mean(z, axis=-1, keepdims=True)
    var = jnp.mean((z - mean) ** 2, axis=-1, keepdims=True)
    y = (z - mean) * jax.lax.rsqrt(var + LN_EPS) * params["ln_gamma"] + params["ln_beta"]
    out_ch = xf * jax.nn.sigmoid(y)

    # spatial branch
    xq = jnp.einsum("oc,bcp->bop", params["wq_sp"], xf) + params["bq_sp"][None]
    xq = jnp.max(xq, axis=-1, keepdims=True)                               # (B, Cm, 1)
    sm = jax.nn.softmax(xq, axis=1)
    xv_sp = jnp.einsum("oc,bcp->bop", params["wv_sp"], xf) + params["bv_sp"][None]
    s = jnp.sum(sm * xv_sp, axis=1, keepdims=True)                         # (B, 1, HW)
    out_sp = xf * jax.nn.sigmoid(s)

    return (out_ch + out_sp).reshape(B, C, H, W)


def init_params(key, in_channels, channel_factor=0.5):
    cm = int(in_channels * channel_factor)
    c = in_channels
    ks = jax.random.split(key, 10)

    def conv_init(k, out_c, in_c):
        # mimic nn.Conv2d kaiming-uniform-ish scale: U(-1/sqrt(in_c), 1/sqrt(in_c))
        bound = 1.0 / math.sqrt(in_c)
        kw, kb = jax.random.split(k)
        w = jax.random.uniform(kw, (out_c, in_c), jnp.float32, -bound, bound)
        b = jax.random.uniform(kb, (out_c, 1), jnp.float32, -bound, bound)
        return w, b

    wv_ch, bv_ch = conv_init(ks[0], cm, c)
    wq_ch, bq_ch = conv_init(ks[1], 1, c)
    wz, bz = conv_init(ks[2], c, cm)
    wq_sp, bq_sp = conv_init(ks[3], cm, c)
    wv_sp, bv_sp = conv_init(ks[4], cm, c)

    return dict(
        wv_ch=wv_ch, bv_ch=bv_ch,
        wq_ch=wq_ch, bq_ch=bq_ch,
        wz=wz, bz=bz,
        # nn.LayerNorm(1) default init: gamma=1, beta=0
        ln_gamma=jnp.ones((1, 1), jnp.float32),
        ln_beta=jnp.zeros((1, 1), jnp.float32),
        wq_sp=wq_sp, bq_sp=bq_sp,
        wv_sp=wv_sp, bv_sp=bv_sp,
    )


if __name__ == "__main__":
    B, C, H, W = 2, 4, 16, 16
    key = jax.random.PRNGKey(0)
    kx, kp = jax.random.split(key)
    x = jax.random.normal(kx, (B, C, H, W), jnp.float32)
    params = init_params(kp, in_channels=C, channel_factor=0.5)

    out = psa_forward(x, params)
    out = jax.block_until_ready(out)

    ref = psa_reference(x, params)
    np.testing.assert_allclose(np.asarray(out), np.asarray(ref), rtol=1e-5, atol=1e-5)

    print("KERNEL_OK")
</pallas_src>

<mosaic_0001>
module attributes {stable_mosaic.version = 11 : i64} {
  func.func @_psa_stats_kernel(%arg0: i32, %arg1: i32, %arg2: memref<1x4x256xf32, #tpu.memory_space<vmem>>, %arg3: memref<2x4xf32, #tpu.memory_space<vmem>>, %arg4: memref<2x1xf32, #tpu.memory_space<vmem>>, %arg5: memref<2x4xf32, #tpu.memory_space<vmem>>, %arg6: memref<2x1xf32, #tpu.memory_space<vmem>>, %arg7: memref<1x1x4xf32, #tpu.memory_space<vmem>>, %arg8: memref<1x1x1xf32, #tpu.memory_space<vmem>>, %arg9: memref<2x1xf32, #tpu.memory_space<vmem>>) attributes {dimension_semantics = [#tpu.dimension_semantics<parallel>, #tpu.dimension_semantics<arbitrary>], iteration_bounds = array<i64: 2, 1>, scalar_prefetch = 0 : i64, scratch_operands = 1 : i64, tpu.core_type = #tpu.core_type<tc>, window_params = [{transform_indices = @transform_0, window_bounds = array<i64: 1, 4, 256>}, {pipeline_mode = #tpu.pipeline_mode<synchronous>, transform_indices = @transform_1, window_bounds = array<i64: 2, 4>}, {pipeline_mode = #tpu.pipeline_mode<synchronous>, transform_indices = @transform_2, window_bounds = array<i64: 2, 1>}, {pipeline_mode = #tpu.pipeline_mode<synchronous>, transform_indices = @transform_3, window_bounds = array<i64: 2, 4>}, {pipeline_mode = #tpu.pipeline_mode<synchronous>, transform_indices = @transform_4, window_bounds = array<i64: 2, 1>}, {transform_indices = @transform_5, window_bounds = array<i64: 1, 1, 4>}, {transform_indices = @transform_6, window_bounds = array<i64: 1, 1, 1>}]} {
    %c0 = arith.constant 0 : index
    %c0_0 = arith.constant 0 : index
    %c0_1 = arith.constant 0 : index
    %0 = vector.load %arg2[%c0, %c0_0, %c0_1] : memref<1x4x256xf32, #tpu.memory_space<vmem>>, vector<1x4x256xf32>
    %1 = vector.shape_cast %0 : vector<1x4x256xf32> to vector<4x256xf32>
    %c0_2 = arith.constant 0 : index
    %c0_3 = arith.constant 0 : index
    %2 = vector.load %arg3[%c0_2, %c0_3] : memref<2x4xf32, #tpu.memory_space<vmem>>, vector<2x4xf32>
    %cst = arith.constant dense<0.000000e+00> : vector<2x256xf32>
    %3 = tpu.matmul %2, %1, %cst {dimension_numbers = #tpu.dot_dimension_numbers<[1], [0], [0], [1], [0, 0, 1, 1], [], []>} : vector<2x4xf32>, vector<4x256xf32>, vector<2x256xf32> -> vector<2x256xf32>
    %c0_4 = arith.constant 0 : index
    %c0_5 = arith.constant 0 : index
    %4 = vector.load %arg4[%c0_4, %c0_5] : memref<2x1xf32, #tpu.memory_space<vmem>>, vector<2x1xf32>
    %5 = vector.broadcast %4 : vector<2x1xf32> to vector<2x256xf32>
    %6 = arith.addf %3, %5 : vector<2x256xf32>
    %cst_6 = arith.constant dense<0xFF800000> : vector<2xf32>
    %7 = vector.multi_reduction <maximumf>, %6, %cst_6 [1] : vector<2x256xf32> to vector<2xf32>
    %8 = vector.shape_cast %7 : vector<2xf32> to vector<2x1xf32>
    %c0_i32 = arith.constant 0 : i32
    %9 = arith.cmpi eq, %arg1, %c0_i32 : i32
    %10 = arith.extui %9 : i1 to i32
    %c0_i32_7 = arith.constant 0 : i32
    %11 = arith.cmpi ne, %10, %c0_i32_7 : i32
    scf.if %11 {
      %c0_12 = arith.constant 0 : index
      %c0_13 = arith.constant 0 : index
      %18 = vector.load %arg9[%c0_12, %c0_13] : memref<2x1xf32, #tpu.memory_space<vmem>>, vector<2x1xf32>
      tpu.vector_store %arg9[%c0_12, %c0_13], %8 {strides = array<i32>} : memref<2x1xf32, #tpu.memory_space<vmem>>, vector<2x1xf32>,
    } else {
    }
    %c0_i32_8 = arith.constant 0 : i32
    %12 = arith.cmpi sgt, %arg1, %c0_i32_8 : i32
    %13 = arith.extui %12 : i1 to i32
    %c0_i32_9 = arith.constant 0 : i32
    %14 = arith.cmpi ne, %13, %c0_i32_9 : i32
    scf.if %14 {
      %c0_12 = arith.constant 0 : index
      %c0_13 = arith.constant 0 : index
      %18 = vector.load %arg9[%c0_12, %c0_13] : memref<2x1xf32, #tpu.memory_space<vmem>>, vector<2x1xf32>
      %19 = arith.maximumf %18, %8 : vector<2x1xf32>
      %c0_14 = arith.constant 0 : index
      %c0_15 = arith.constant 0 : index
      %20 = vector.load %arg9[%c0_14, %c0_15] : memref<2x1xf32, #tpu.memory_space<vmem>>, vector<2x1xf32>
      tpu.vector_store %arg9[%c0_14, %c0_15], %19 {strides = array<i32>} : memref<2x1xf32, #tpu.memory_space<vmem>>, vector<2x1xf32>,
    } else {
    }
    %c0_i32_10 = arith.constant 0 : i32
    %15 = arith.cmpi eq, %arg1, %c0_i32_10 : i32
    %16 = arith.extui %15 : i1 to i32
    %c0_i32_11 = arith.constant 0 : i32
    %17 = arith.cmpi ne, %16, %c0_i32_11 : i32
    scf.if %17 {
      %c0_12 = arith.constant 0 : index
      %c0_13 = arith.constant 0 : index
      %18 = vector.load %arg9[%c0_12, %c0_13] : memref<2x1xf32, #tpu.memory_space<vmem>>, vector<2x1xf32>
      %cst_14 = arith.constant dense<0xFF800000> : vector<1xf32>
      %19 = vector.multi_reduction <maximumf>, %18, %cst_14 [0] : vector<2x1xf32> to vector<1xf32>
      %20 = vector.shape_cast %19 : vector<1xf32> to vector<1x1xf32>
      %21 = vector.broadcast %20 : vector<1x1xf32> to vector<2x1xf32>
      %22 = arith.subf %18, %21 : vector<2x1xf32>
      %23 = math.exp %22 : vector<2x1xf32>
      %cst_15 = arith.constant dense<0.000000e+00> : vector<1xf32>
      %24 = vector.multi_reduction <add>, %23, %cst_15 [0] : vector<2x1xf32> to vector<1xf32>
      %25 = vector.shape_cast %24 : vector<1xf32> to vector<1x1xf32>
      %26 = vector.broadcast %25 : vector<1x1xf32> to vector<2x1xf32>
      %27 = arith.divf %23, %26 : vector<2x1xf32>
      %c0_16 = arith.constant 0 : index
      %c0_17 = arith.constant 0 : index
      %28 = vector.load %arg5[%c0_16, %c0_17] : memref<2x4xf32, #tpu.memory_space<vmem>>, vector<2x4xf32>
      %29 = vector.broadcast %27 : vector<2x1xf32> to vector<2x4xf32>
      %30 = arith.mulf %29, %28 : vector<2x4xf32>
      %cst_18 = arith.constant dense<0.000000e+00> : vector<4xf32>
      %31 = vector.multi_reduction <add>, %30, %cst_18 [0] : vector<2x4xf32> to vector<4xf32>
      %32 = vector.shape_cast %31 : vector<4xf32> to vector<1x4xf32>
      %c0_19 = arith.constant 0 : index
      %c0_20 = arith.constant 0 : index
      %c0_21 = arith.constant 0 : index
      %33 = vector.load %arg7[%c0_19, %c0_20, %c0_21] : memref<1x1x4xf32, #tpu.memory_space<vmem>>, vector<1x1x4xf32>
      %34 = vector.shape_cast %33 : vector<1x1x4xf32> to vector<1x4xf32>
      %35 = vector.shape_cast %32 : vector<1x4xf32> to vector<1x1x4xf32>
      tpu.vector_store %arg7[%c0_19, %c0_20, %c0_21], %35 {strides = array<i32>} : memref<1x1x4xf32, #tpu.memory_space<vmem>>, vector<1x1x4xf32>,
      %c0_22 = arith.constant 0 : index
      %c0_23 = arith.constant 0 : index
      %36 = vector.load %arg6[%c0_22, %c0_23] : memref<2x1xf32, #tpu.memory_space<vmem>>, vector<2x1xf32>
      %37 = arith.mulf %27, %36 : vector<2x1xf32>
      %cst_24 = arith.constant dense<0.000000e+00> : vector<1xf32>
      %38 = vector.multi_reduction <add>, %37, %cst_24 [0] : vector<2x1xf32> to vector<1xf32>
      %39 = vector.shape_cast %38 : vector<1xf32> to vector<1x1xf32>
      %c0_25 = arith.constant 0 : index
      %c0_26 = arith.constant 0 : index
      %c0_27 = arith.constant 0 : index
      %40 = vector.load %arg8[%c0_25, %c0_26, %c0_27] : memref<1x1x1xf32, #tpu.memory_space<vmem>>, vector<1x1x1xf32>
      %41 = vector.shape_cast %40 : vector<1x1x1xf32> to vector<1x1xf32>
      %42 = vector.shape_cast %39 : vector<1x1xf32> to vector<1x1x1xf32>
      tpu.vector_store %arg8[%c0_25, %c0_26, %c0_27], %42 {strides = array<i32>} : memref<1x1x1xf32, #tpu.memory_space<vmem>>, vector<1x1x1xf32>,
    } else {
    }
    return
  }
  func.func @transform_0(%arg0: i32, %arg1: i32) -> (i32, i32, i32) {
    %c0_i32 = arith.constant 0 : i32
    %c0_i32_0 = arith.constant 0 : i32
    return %arg0, %c0_i32, %arg1 : i32, i32, i32
  }
  func.func @transform_1(%arg0: i32, %arg1: i32) -> (i32, i32) {
    %c0_i32 = arith.constant 0 : i32
    %c0_i32_0 = arith.constant 0 : i32
    %c0_i32_1 = arith.constant 0 : i32
    return %c0_i32, %c0_i32_0 : i32, i32
  }
  func.func @transform_2(%arg0: i32, %arg1: i32) -> (i32, i32) {
    %c0_i32 = arith.constant 0 : i32
    %c0_i32_0 = arith.constant 0 : i32
    %c0_i32_1 = arith.constant 0 : i32
    return %c0_i32, %c0_i32_0 : i32, i32
  }
  func.func @transform_3(%arg0: i32, %arg1: i32) -> (i32, i32) {
    %c0_i32 = arith.constant 0 : i32
    %c0_i32_0 = arith.constant 0 : i32
    %c0_i32_1 = arith.constant 0 : i32
    return %c0_i32, %c0_i32_0 : i32, i32
  }
  func.func @transform_4(%arg0: i32, %arg1: i32) -> (i32, i32) {
    %c0_i32 = arith.constant 0 : i32
    %c0_i32_0 = arith.constant 0 : i32
    %c0_i32_1 = arith.constant 0 : i32
    return %c0_i32, %c0_i32_0 : i32, i32
  }
  func.func @transform_5(%arg0: i32, %arg1: i32) -> (i32, i32, i32) {
    %c0_i32 = arith.constant 0 : i32
    %c0_i32_0 = arith.constant 0 : i32
    %c0_i32_1 = arith.constant 0 : i32
    return %arg0, %c0_i32, %c0_i32_0 : i32, i32, i32
  }
  func.func @transform_6(%arg0: i32, %arg1: i32) -> (i32, i32, i32) {
    %c0_i32 = arith.constant 0 : i32
    %c0_i32_0 = arith.constant 0 : i32
    %c0_i32_1 = arith.constant 0 : i32
    return %arg0, %c0_i32, %c0_i32_0 : i32, i32, i32
  }
}

</mosaic_0001>

<llo_original>
// kernel: tpu_custom_call.1
$region0: #{tpu_custom_call.1}
  #allocation0 [shape = 'u32[]', space=smem, size = 0x4, offset = 0x4, fixed_abs, tag = 'smem constant byte address 0x4 - core index']
  #allocation1 [shape = 'u32[144,128]{1,0:T(1,128)}', space=vmem, size = 0x12000, scoped, tag = 'internal scratch']
  #allocation2 [shape = 'f32[2,1]{1,0:T(2,128)}', space=vmem, size = 0x400, scoped, tag = 'scratch operand']
  %s0 = inlined_call_operand.hbm [shape: f32[2,4,256], index: 0, kind: input, shape index: {}]
  %s1 = inlined_call_operand.vmem [shape: f32[2,4], index: 1, kind: input, shape index: {}]
  %s2 = inlined_call_operand.vmem [shape: f32[2,1], index: 2, kind: input, shape index: {}]
  %s3 = inlined_call_operand.vmem [shape: f32[2,4], index: 3, kind: input, shape index: {}]
  %s4 = inlined_call_operand.vmem [shape: f32[2,1], index: 4, kind: input, shape index: {}]
  %s5 = inlined_call_operand.hbm [shape: f32[2,1,4], index: 5, kind: output, shape index: {0}]
  %s6 = inlined_call_operand.vmem [shape: f32[2,1,1], index: 6, kind: output, shape index: {1}]
  %7 = xla_tuple %s5, %s6
  %s8 = sld [smem:[#allocation0]]
  $region77: #{tpu_custom_call.1} parent=0
    _
  %s10 = ssub.s32 1, %s8
  %s11 = scalar_select 0, %s10, %s8
  $region1: #{tpu_custom_call.1} parent=0
    #allocation3 [shape = 'u8[8192]{0}', space=vmem, size = 0x2000, scoped, tag = 'input window, operand 0']
    #allocation4 [shape = 's32[2]{0}', space=sflag, size = 0x8, scoped, tag = 'scoped memory for tpu_custom_call.1']
    #allocation5 [shape = 's32[2]{0}', space=sflag, size = 0x8, scoped, tag = 'scoped memory for tpu_custom_call.1']
    #allocation6 [shape = 'u8[1024]{0}', space=vmem, size = 0x400, scoped, tag = 'output window, operand 0']
    %12 = vsyncpa [#allocation4], 0
    %s13 = scalar_lea.sflag [#allocation4], 1
    %14 = vsyncpa %s13, 0
    %15 = vsyncpa [#allocation5], 0
    %s16 = scalar_lea.sflag [#allocation5], 1
    %17 = vsyncpa %s16, 0
    loop: start=0, step=1, limit=4
    $region2: #{tpu_custom_call.1} parent=1 // loop_pre_header
      _
    $region3: #{tpu_custom_call.1} parent=1 // loop_header
      %s19 = sphi 0, %s23
      %p20 = scmp.ge.s32.totalorder %s19, 4
      %s26 = sphi 0, %s38
      %s27 = sphi 0, %s34
      %s28 = sphi 0, %s26
      %s29 = sphi 0, %s27
      %s30 = sphi 0, %s28
      %s31 = sphi 0, %s29
      %s43 = sphi 0, %s45
      %s46 = sphi 0, %s43
      %s47 = sphi 0, %s46
      %s63 = sphi 0, %s47
      %s67 = sphi 0, %s67
      %s69 = sphi 0, %s67
      %s70 = sphi 0, %s69
      %s84 = sphi 0, %s70
      %s88 = sphi 0, %s88
      %s90 = sphi 0, %s88
      %s91 = sphi 0, %s90
      %s105 = sphi 0, %s91
      %s109 = sphi 0, %s109
      %s111 = sphi 0, %s109
      %s112 = sphi 0, %s111
      %s126 = sphi 0, %s112
      %s130 = sphi 0, %s130
      %s132 = sphi 0, %s130
      %s133 = sphi 0, %s132
      %s147 = sphi 0, %s133
      %s153 = sphi 0, %s155
      %s156 = sphi 0, %s153
      %s157 = sphi 0, %s156
      %s173 = sphi 0, %s157
      %s179 = sphi 0, %s181
      %s182 = sphi 0, %s179
      %s183 = sphi 0, %s182
      %s199 = sphi 0, %s183
    $region4: #{tpu_custom_call.1} parent=1 // loop_header_branch
      %22 = sbr.rel (%p20) target = $region8
    $region5: #{tpu_custom_call.1} parent=1 // loop_body
      %s24 = ssub.s32 %s19, 1
      %s25 = ssub.s32 %s19, 2
      %s32 = sadd.s32 1, %s27
      %p33 = scmp.ge.s32.totalorder %s32, 1
      %s34 = scalar_select %p33, 0, %s32
      %s35 = sadd.s32 1, %s26
      %s36 = scalar_select %p33, %s35, %s26
      %p37 = scmp.ge.s32.totalorder %s36, 2
      %s38 = scalar_select %p37, 0, %s36
      %s39 = ssub.s32 %s26, %s38
      %s40 = ssub.s32 %s27, %s34
      %s41 = sor.u32 %s39, %s40
      %p42 = scmp.eq.s32.totalorder %s41, 0
      %s44 = sadd.s32 %s43, 1
      %s45 = scalar_select %p42, %s43, %s44
      %p48 = pneg %p42
      %p49 = scmp.eq.s32.totalorder %s19, 1
      %p50 = por %p48, %p49
      %p51 = scmp.ne.s32.totalorder %s43, %s46
      %p52 = scmp.eq.s32.totalorder %s19, 0
      %p53 = por %p51, %p52
      %p54 = scmp.ne.s32.totalorder %s43, %s46
      %p55 = scmp.eq.s32.totalorder %s24, 1
      %p56 = por %p54, %p55
      %p57 = scmp.ne.s32.totalorder %s46, %s47
      %p58 = scmp.eq.s32.totalorder %s24, 0
      %p59 = por %p57, %p58
      %p60 = scmp.ne.s32.totalorder %s46, %s47
      %p61 = scmp.eq.s32.totalorder %s25, 1
      %p62 = por %p60, %p61
      %p64 = scmp.ne.s32.totalorder %s47, %s63
      %p65 = scmp.eq.s32.totalorder %s25, 0
      %p66 = por %p64, %p65
      %s68 = sadd.s32 %s67, 1
      %p71 = scmp.eq.s32.totalorder %s19, 1
      %p72 = scmp.ne.s32.totalorder %s67, %s69
      %p73 = scmp.eq.s32.totalorder %s19, 0
      %p74 = por %p72, %p73
      %p75 = scmp.ne.s32.totalorder %s67, %s69
      %p76 = scmp.eq.s32.totalorder %s24, 1
      %p77 = por %p75, %p76
      %p78 = scmp.ne.s32.totalorder %s69, %s70
      %p79 = scmp.eq.s32.totalorder %s24, 0
      %p80 = por %p78, %p79
      %p81 = scmp.ne.s32.totalorder %s69, %s70
      %p82 = scmp.eq.s32.totalorder %s25, 1
      %p83 = por %p81, %p82
      %p85 = scmp.ne.s32.totalorder %s70, %s84
      %p86 = scmp.eq.s32.totalorder %s25, 0
      %p87 = por %p85, %p86
      %s89 = sadd.s32 %s88, 1
      %p92 = scmp.eq.s32.totalorder %s19, 1
      %p93 = scmp.ne.s32.totalorder %s88, %s90
      %p94 = scmp.eq.s32.totalorder %s19, 0
      %p95 = por %p93, %p94
      %p96 = scmp.ne.s32.totalorder %s88, %s90
      %p97 = scmp.eq.s32.totalorder %s24, 1
      %p98 = por %p96, %p97
      %p99 = scmp.ne.s32.totalorder %s90, %s91
      %p100 = scmp.eq.s32.totalorder %s24, 0
      %p101 = por %p99, %p100
      %p102 = scmp.ne.s32.totalorder %s90, %s91
      %p103 = scmp.eq.s32.totalorder %s25, 1
      %p104 = por %p102, %p103
      %p106 = scmp.ne.s32.totalorder %s91, %s105
      %p107 = scmp.eq.s32.totalorder %s25, 0
      %p108 = por %p106, %p107
      %s110 = sadd.s32 %s109, 1
      %p113 = scmp.eq.s32.totalorder %s19, 1
      %p114 = scmp.ne.s32.totalorder %s109, %s111
      %p115 = scmp.eq.s32.totalorder %s19, 0
      %p116 = por %p114, %p115
      %p117 = scmp.ne.s32.totalorder %s109, %s111
      %p118 = scmp.eq.s32.totalorder %s24, 1
      %p119 = por %p117, %p118
      %p120 = scmp.ne.s32.totalorder %s111, %s112
      %p121 = scmp.eq.s32.totalorder %s24, 0
      %p122 = por %p120, %p121
      %p123 = scmp.ne.s32.totalorder %s111, %s112
      %p124 = scmp.eq.s32.totalorder %s25, 1
      %p125 = por %p123, %p124
      %p127 = scmp.ne.s32.totalorder %s112, %s126
      %p128 = scmp.eq.s32.totalorder %s25, 0
      %p129 = por %p127, %p128
      %s131 = sadd.s32 %s130, 1
      %p134 = scmp.eq.s32.totalorder %s19, 1
      %p135 = scmp.ne.s32.totalorder %s130, %s132
      %p136 = scmp.eq.s32.totalorder %s19, 0
      %p137 = por %p135, %p136
      %p138 = scmp.ne.s32.totalorder %s130, %s132
      %p139 = scmp.eq.s32.totalorder %s24, 1
      %p140 = por %p138, %p139
      %p141 = scmp.ne.s32.totalorder %s132, %s133
      %p142 = scmp.eq.s32.totalorder %s24, 0
      %p143 = por %p141, %p142
      %p144 = scmp.ne.s32.totalorder %s132, %s133
      %p145 = scmp.eq.s32.totalorder %s25, 1
      %p146 = por %p144, %p145
      %p148 = scmp.ne.s32.totalorder %s133, %s147
      %p149 = scmp.eq.s32.totalorder %s25, 0
      %p150 = por %p148, %p149
      %s151 = ssub.s32 %s26, %s38
      %p152 = scmp.eq.s32.totalorder %s151, 0
      %s154 = sadd.s32 %s153, 1
      %s155 = scalar_select %p152, %s153, %s154
      %p158 = pneg %p152
      %p159 = scmp.eq.s32.totalorder %s19, 1
      %p160 = por %p158, %p159
      %p161 = scmp.ne.s32.totalorder %s153, %s156
      %p162 = scmp.eq.s32.totalorder %s19, 0
      %p163 = por %p161, %p162
      %p164 = scmp.ne.s32.totalorder %s153, %s156
      %p165 = scmp.eq.s32.totalorder %s24, 1
      %p166 = por %p164, %p165
      %p167 = scmp.ne.s32.totalorder %s156, %s157
      %p168 = scmp.eq.s32.totalorder %s24, 0
      %p169 = por %p167, %p168
      %p170 = scmp.ne.s32.totalorder %s156, %s157
      %p171 = scmp.eq.s32.totalorder %s25, 1
      %p172 = por %p170, %p171
      %p174 = scmp.ne.s32.totalorder %s157, %s173
      %p175 = scmp.eq.s32.totalorder %s25, 0
      %p176 = por %p174, %p175
      %s177 = ssub.s32 %s26, %s38
      %p178 = scmp.eq.s32.totalorder %s177, 0
      %s180 = sadd.s32 %s179, 1
      %s181 = scalar_select %p178, %s179, %s180
      %p184 = pneg %p178
      %p185 = scmp.eq.s32.totalorder %s19, 1
      %p186 = por %p184, %p185
      %p187 = scmp.ne.s32.totalorder %s179, %s182
      %p188 = scmp.eq.s32.totalorder %s19, 0
      %p189 = por %p187, %p188
      %p190 = scmp.ne.s32.totalorder %s179, %s182
      %p191 = scmp.eq.s32.totalorder %s24, 1
      %p192 = por %p190, %p191
      %p193 = scmp.ne.s32.totalorder %s182, %s183
      %p194 = scmp.eq.s32.totalorder %s24, 0
      %p195 = por %p193, %p194
      %p196 = scmp.ne.s32.totalorder %s182, %s183
      %p197 = scmp.eq.s32.totalorder %s25, 1
      %p198 = por %p196, %p197
      %p200 = scmp.ne.s32.totalorder %s183, %s199
      %p201 = scmp.eq.s32.totalorder %s25, 0
      %p202 = por %p200, %p201
      %p203 = scmp.le.s32.totalorder 1, %s19
      %p204 = scmp.lt.s32.totalorder %s19, 3
      %p205 = pnand %p203, %p204
      %p206 = pneg %p205
      // Predicated region
      $region9: #{tpu_custom_call.1} parent=5 // pred_check
        _
      $region10: #{tpu_custom_call.1} parent=5 // pred_check_branch
        %208 = sbr.rel (%p205) target = $region12
      $region11: #{tpu_custom_call.1} parent=5 // pred_region
        %s209 = ssub.s32 %s19, 1
        // Predicated region
        $region13: #{tpu_custom_call.1} parent=11 // pred_check
          %p210 = pneg %p80
        $region14: #{tpu_custom_call.1} parent=11 // pred_check_branch
          %212 = sbr.rel (%p210) target = $region16
        $region15: #{tpu_custom_call.1} parent=11 // pred_region
          _
        $region16: #{tpu_custom_call.1} parent=11 // pred_fallthru
          _
        // Predicated region
        $region17: #{tpu_custom_call.1} parent=11 // pred_check
          %p213 = pneg %p101
        $region18: #{tpu_custom_call.1} parent=11 // pred_check_branch
          %215 = sbr.rel (%p213) target = $region20
        $region19: #{tpu_custom_call.1} parent=11 // pred_region
          _
        $region20: #{tpu_custom_call.1} parent=11 // pred_fallthru
          _
        // Predicated region
        $region21: #{tpu_custom_call.1} parent=11 // pred_check
          %p216 = pneg %p122
        $region22: #{tpu_custom_call.1} parent=11 // pred_check_branch
          %218 = sbr.rel (%p216) target = $region24
        $region23: #{tpu_custom_call.1} parent=11 // pred_region
          _
        $region24: #{tpu_custom_call.1} parent=11 // pred_fallthru
          _
        // Predicated region
        $region25: #{tpu_custom_call.1} parent=11 // pred_check
          %p219 = pneg %p143
        $region26: #{tpu_custom_call.1} parent=11 // pred_check_branch
          %221 = sbr.rel (%p219) target = $region28
        $region27: #{tpu_custom_call.1} parent=11 // pred_region
          _
        $region28: #{tpu_custom_call.1} parent=11 // pred_fallthru
          _
      $region12: #{tpu_custom_call.1} parent=5 // pred_fallthru
        _
      %p222 = scmp.lt.s32.totalorder %s19, 2
      // Predicated region
      $region29: #{tpu_custom_call.1} parent=5 // pred_check
        %p223 = pneg %p222
      $region30: #{tpu_custom_call.1} parent=5 // pred_check_branch
        %225 = sbr.rel (%p223) target = $region32
      $region31: #{tpu_custom_call.1} parent=5 // pred_region
        // Predicated region
        $region33: #{tpu_custom_call.1} parent=31 // pred_check
          %p226 = pneg %p53
        $region34: #{tpu_custom_call.1} parent=31 // pred_check_branch
          %228 = sbr.rel (%p226) target = $region36
        $region35: #{tpu_custom_call.1} parent=31 // pred_region
          %s229 = sand.u32 %s43, 1
          %s230 = scalar_lea.sflag [#allocation4], %s229
          %s231 = sand.u32 %s43, 1
          %s232 = smul.addr %s231, 8
          %s233 = scalar_lea.vmem [#allocation3], %s232
          %s234 = smul.u32 2, %s27
          %s236 = ssub.s32 128, 128
          %237 = vsyncadd %s230, %s236
          %s238 = smul.addr %s26, 2
          %s239 = sadd.s32 %s234, %s238
          %s240 = smul.addr %s239, 64
          %s241 = scalar_lea.hbm %s0, %s240
          %s243 = sshll.u32 %s233, 4
          %s244 = int_to_ptr.vmem [resolvable:$true] %s243
          %246 = dma.hbm_to_vmem [thread:$0]  %s241, 128, %s244, %s230
        $region36: #{tpu_custom_call.1} parent=31 // pred_fallthru
          _
      $region32: #{tpu_custom_call.1} parent=5 // pred_fallthru
        _
      %p247 = scmp.le.s32.totalorder 1, %s19
      %p248 = scmp.lt.s32.totalorder %s19, 3
      %p249 = pnand %p247, %p248
      %p250 = pneg %p249
      // Predicated region
      $region37: #{tpu_custom_call.1} parent=5 // pred_check
        _
      $region38: #{tpu_custom_call.1} parent=5 // pred_check_branch
        %252 = sbr.rel (%p249) target = $region40
      $region39: #{tpu_custom_call.1} parent=5 // pred_region
        %s253 = ssub.s32 %s19, 1
        %s254 = sand.u32 %s46, 1
        %s255 = scalar_lea.sflag [#allocation4], %s254
        %s256 = sand.u32 %s46, 1
        %s257 = smul.addr %s256, 8
        %s258 = scalar_lea.vmem [#allocation3], %s257
        // Predicated region
        $region41: #{tpu_custom_call.1} parent=39 // pred_check
          %p259 = pneg %p59
        $region42: #{tpu_custom_call.1} parent=39 // pred_check_branch
          %261 = sbr.rel (%p259) target = $region44
        $region43: #{tpu_custom_call.1} parent=39 // pred_region
          %262 = dma.done %s255, 128
        $region44: #{tpu_custom_call.1} parent=39 // pred_fallthru
          _
        %s263 = sand.u32 %s46, 1
        %s264 = scalar_lea.sflag [#allocation4], %s263
        %s265 = sand.u32 %s46, 1
        %s266 = smul.addr %s265, 8
        %s267 = scalar_lea.vmem [#allocation3], %s266
        %p268 = pneg %p59
        %p269 = pneg %p56
        %p270 = pneg %p80
        %p271 = pneg %p77
        %p272 = pneg %p101
        %p273 = pneg %p98
        %p274 = pneg %p122
        %p275 = pneg %p119
        %p276 = pneg %p143
        %p277 = pneg %p140
        %p278 = pneg %p169
        %p279 = pneg %p166
        %s280 = sand.u32 %s156, 1
        %s281 = scalar_lea.sflag [#allocation5], %s280
        %s282 = sand.u32 %s156, 1
        %s283 = scalar_lea.vmem [#allocation6], %s282
        %p284 = pneg %p195
        %p285 = pneg %p192
        %p286 = scmp.lt.s32.totalorder %s28, 1
        %s287 = scalar_select %p286, %s28, 1
        %s288 = scalar_lea.vmem %s6, %s287
        %s289 = smul.u32 2, %s29
        %p290 = scmp.lt.s32.totalorder %s28, 1
        %s291 = scalar_select %p290, %s28, 1
        %s292 = scalar_lea.vmem %s6, %s291
        %v293 = vld [vmem:[%s258] sm:$0xff]
        %v294 = vld [vmem:[%s1] sm:$0x3]
        %v295 = vld [vmem:[%s2] sm:$0x3]
        %297 = vset.pattern.permute.xlu0 0
        %298 = vperm.xlu0 %297, %v295
        %v299 = vpop.permute.xlu0 %298
        %v302 = vcombine.high %v293, %v293
        %vm303 = vcmask 31744
        %v305 = vsel %vm303, %v294, 0
        %vm307 = vcmask 1043456
        %v308 = vsel %vm307, %v293, 0
        %v310 = vsel %vm307, %v302, 0
        %312 = vmatprep.subr.mxu0 %v310
        %313 = vmatpush1.msra.mxu0 %v308
        %314 = vmatprep.subr.mxu0 0.0
        %315 = vmatpush1.msra.mxu0 0.0
        %316 = vmatprep.subr.mxu0 0.0
        %317 = vmatpush1.msra.mxu0 0.0
        %318 = vmatprep.subr.mxu0 0.0
        %319 = vmatpush1.msra.mxu0 0.0
        %320 = vmatprep.subr.mxu0 0.0
        %321 = vmatpush1.msra.mxu0 0.0
        %322 = vmatprep.subr.mxu0 0.0
        %323 = vmatpush1.msra.mxu0 0.0
        %324 = vmatprep.subr.mxu0 0.0
        %325 = vmatpush1.msra.mxu0 0.0
        %326 = vmatprep.subr.mxu0 0.0
        %327 = vmatpush1.msra.mxu0 0.0
        %328 = vmatprep.subr.mxu0 0.0
        %329 = vmatpush1.msra.mxu0 0.0
        %330 = vmatprep.subr.mxu0 0.0
        %331 = vmatpush1.msra.mxu0 0.0
        %332 = vmatprep.subr.mxu0 0.0
        %333 = vmatpush1.msra.mxu0 0.0
        %334 = vmatprep.subr.mxu0 0.0
        %335 = vmatpush1.msra.mxu0 0.0
        %336 = vmatprep.subr.mxu0 0.0
        %337 = vmatpush1.msra.mxu0 0.0
        %338 = vmatprep.subr.mxu0 0.0
        %339 = vmatpush1.msra.mxu0 0.0
        %340 = vmatprep.subr.mxu0 0.0
        %341 = vmatpush1.msra.mxu0 0.0
        %342 = vmatprep.subr.mxu0 0.0
        %343 = vmatpush1.msra.mxu0 0.0
        %344 = vmatprep.subr.mxu0 0.0
        %345 = vmatpush1.msra.mxu0 0.0
        %346 = vmatprep.subr.mxu0 0.0
        %347 = vmatpush1.msra.mxu0 0.0
        %348 = vmatprep.subr.mxu0 0.0
        %349 = vmatpush1.msra.mxu0 0.0
        %350 = vmatprep.subr.mxu0 0.0
        %351 = vmatpush1.msra.mxu0 0.0
        %352 = vmatprep.subr.mxu0 0.0
        %353 = vmatpush1.msra.mxu0 0.0
        %354 = vmatprep.subr.mxu0 0.0
        %355 = vmatpush1.msra.mxu0 0.0
        %356 = vmatprep.subr.mxu0 0.0
        %357 = vmatpush1.msra.mxu0 0.0
        %358 = vmatprep.subr.mxu0 0.0
        %359 = vmatpush1.msra.mxu0 0.0
        %360 = vmatprep.subr.mxu0 0.0
        %361 = vmatpush1.msra.mxu0 0.0
        %362 = vmatprep.subr.mxu0 0.0
        %363 = vmatpush1.msra.mxu0 0.0
        %364 = vmatprep.subr.mxu0 0.0
        %365 = vmatpush1.msra.mxu0 0.0
        %366 = vmatprep.subr.mxu0 0.0
        %367 = vmatpush1.msra.mxu0 0.0
        %368 = vmatprep.subr.mxu0 0.0
        %369 = vmatpush1.msra.mxu0 0.0
        %370 = vmatprep.subr.mxu0 0.0
        %371 = vmatpush1.msra.mxu0 0.0
        %372 = vmatprep.subr.mxu0 0.0
        %373 = vmatpush1.msra.mxu0 0.0
        %374 = vmatprep.subr.mxu0 0.0
        %375 = vmatpush1.msra.mxu0 0.0
        %376 = vmatprep.mubr.f32.mxu0 0.0
        %377 = vmatmul.mubr.f32.gmra.mrb[0].mxu0 %v305
        %v378 = vpop.f32.mrb[0].mxu0
        %v379 = vadd.f32 %v299, %v378
        %v380 = vpop.f32.mrb[0].mxu0
        %v381 = vadd.f32 %v299, %v380
        %382 = vdwg.mxu0
        %vm383 = vcmask 1041408
        %v384 = vsel %vm383, %v379, -inf
        %v385 = vsel %vm383, %v381, -inf
        %v386 = vmax.f32 %v384, %v385
        %387 = vmax.xlane.f32.xlu0 %v386
        %v388 = vpop.xlane.xlu0 %387
        %p389 = scmp.eq.s32.totalorder %s29, 0
        // Predicated region
        $region45: #{tpu_custom_call.1} parent=39 // pred_check
          %p390 = pneg %p389
        $region46: #{tpu_custom_call.1} parent=39 // pred_check_branch
          %392 = sbr.rel (%p390) target = $region48
        $region47: #{tpu_custom_call.1} parent=39 // pred_region
          %vm393 = vcmask 1024
          %394 = vst.msk [vmem:[#allocation2] sm:$0x3] %vm393, %v388
        $region48: #{tpu_custom_call.1} parent=39 // pred_fallthru
          _
        %p395 = scmp.gt.s32.totalorder %s29, 0
        // Predicated region
        $region49: #{tpu_custom_call.1} parent=39 // pred_check
          %p396 = pneg %p395
        $region50: #{tpu_custom_call.1} parent=39 // pred_check_branch
          %398 = sbr.rel (%p396) target = $region52
        $region51: #{tpu_custom_call.1} parent=39 // pred_region
          %v399 = vld [vmem:[#allocation2] sm:$0x3]
          %v400 = vmax.f32 %v399, %v388
          %vm401 = vcmask 1024
          %402 = vst.msk [vmem:[#allocation2] sm:$0x3] %vm401, %v400
        $region52: #{tpu_custom_call.1} parent=39 // pred_fallthru
          _
        // Predicated region
        $region53: #{tpu_custom_call.1} parent=39 // pred_check
          %p403 = pneg %p389
        $region54: #{tpu_custom_call.1} parent=39 // pred_check_branch
          %405 = sbr.rel (%p403) target = $region56
        $region55: #{tpu_custom_call.1} parent=39 // pred_region
          %v406 = vld [vmem:[#allocation2] sm:$0x3]
          %vm407 = vcmask 1024
          %v408 = vsel %vm407, %v406, -inf
          %v409 = vrot.slane %v408, 4
          %v410 = vmax.f32 %v408, %v409
          %v411 = vrot.slane %v410, 2
          %v412 = vmax.f32 %v410, %v411
          %v413 = vrot.slane %v412, 1
          %v414 = vmax.f32 %v412, %v413
          %v415 = vsub.f32 %v406, %v414
          %v416 = vmul.f32 %v415, 1.442695
          %v417 = vpow.pop %v416
          %v418 = vsel %vm407, %v417, 0.0
          %v419 = vrot.slane %v418, 4
          %v420 = vadd.f32 %v418, %v419
          %v421 = vrot.slane %v420, 2
          %v422 = vadd.f32 %v420, %v421
          %v423 = vrot.slane %v422, 1
          %v424 = vadd.f32 %v422, %v423
          %v425 = vrcp.pop %v424
          %v426 = vmul.f32 %v417, %v425
          %v427 = vld [vmem:[%s3] sm:$0x3]
          %429 = vset.pattern.permute.xlu0 0
          %430 = vperm.xlu0 %429, %v426
          %v431 = vpop.permute.xlu0 %430
          %v433 = vmul.f32 %v431, %v427
          %vm434 = vcmask 25600
          %v435 = vsel %vm434, %v433, 0.0
          %v436 = vrot.slane %v435, 4
          %v437 = vadd.f32 %v435, %v436
          %v438 = vrot.slane %v437, 2
          %v439 = vadd.f32 %v437, %v438
          %v440 = vrot.slane %v439, 1
          %v441 = vadd.f32 %v439, %v440
          %vm442 = vcmask 24576
          %443 = vst.msk [vmem:[%s283] sm:$0x1] %vm442, %v441
          %v444 = vld [vmem:[%s4] sm:$0x3]
          %v445 = vmul.f32 %v426, %v444
          %v446 = vsel %vm407, %v445, 0.0
          %v447 = vrot.slane %v446, 4
          %v448 = vadd.f32 %v446, %v447
          %v449 = vrot.slane %v448, 2
          %v450 = vadd.f32 %v448, %v449
          %v451 = vrot.slane %v450, 1
          %v452 = vadd.f32 %v450, %v451
          %vm453 = vcmask 0
          %454 = vst.msk [vmem:[%s292] sm:$0x1] %vm453, %v452
        $region56: #{tpu_custom_call.1} parent=39 // pred_fallthru
          _
        %s455 = sand.u32 %s156, 1
        %s456 = scalar_lea.sflag [#allocation5], %s455
        %s457 = sand.u32 %s156, 1
        %s458 = scalar_lea.vmem [#allocation6], %s457
        %p459 = scmp.lt.s32.totalorder %s28, 1
        %s460 = scalar_select %p459, %s28, 1
        %s461 = scalar_lea.vmem %s6, %s460
        // Predicated region
        $region57: #{tpu_custom_call.1} parent=39 // pred_check
          %p462 = pneg %p166
        $region58: #{tpu_custom_call.1} parent=39 // pred_check_branch
          %464 = sbr.rel (%p462) target = $region60
        $region59: #{tpu_custom_call.1} parent=39 // pred_region
          %s466 = ssub.s32 16, 16
          %467 = vsyncadd %s456, %s466
          %s468 = smul.addr %s28, 16
          %s469 = scalar_lea.hbm %s5, %s468
          %s471 = sshll.u32 %s458, 4
          %s472 = int_to_ptr.vmem [resolvable:$true] %s471
          %474 = dma.vmem_to_hbm [thread:$0]  %s472, 16, %s469, %s456
        $region60: #{tpu_custom_call.1} parent=39 // pred_fallthru
          _
        // Predicated region
        $region61: #{tpu_custom_call.1} parent=39 // pred_check
          %p475 = pneg %p192
        $region62: #{tpu_custom_call.1} parent=39 // pred_check_branch
          %477 = sbr.rel (%p475) target = $region64
        $region63: #{tpu_custom_call.1} parent=39 // pred_region
          _
        $region64: #{tpu_custom_call.1} parent=39 // pred_fallthru
          _
      $region40: #{tpu_custom_call.1} parent=5 // pred_fallthru
        _
      %p478 = scmp.le.s32.totalorder 2, %s19
      // Predicated region
      $region65: #{tpu_custom_call.1} parent=5 // pred_check
        %p479 = pneg %p478
      $region66: #{tpu_custom_call.1} parent=5 // pred_check_branch
        %481 = sbr.rel (%p479) target = $region68
      $region67: #{tpu_custom_call.1} parent=5 // pred_region
        %s482 = ssub.s32 %s19, 2
        // Predicated region
        $region69: #{tpu_custom_call.1} parent=67 // pred_check
          %p483 = pneg %p172
        $region70: #{tpu_custom_call.1} parent=67 // pred_check_branch
          %485 = sbr.rel (%p483) target = $region72
        $region71: #{tpu_custom_call.1} parent=67 // pred_region
          %s486 = sand.u32 %s157, 1
          %s487 = scalar_lea.sflag [#allocation5], %s486
          %s488 = sand.u32 %s157, 1
          %s489 = scalar_lea.vmem [#allocation6], %s488
          %490 = dma.done %s487, 16
        $region72: #{tpu_custom_call.1} parent=67 // pred_fallthru
          _
        // Predicated region
        $region73: #{tpu_custom_call.1} parent=67 // pred_check
          %p491 = pneg %p198
        $region74: #{tpu_custom_call.1} parent=67 // pred_check_branch
          %493 = sbr.rel (%p491) target = $region76
        $region75: #{tpu_custom_call.1} parent=67 // pred_region
          %p494 = scmp.lt.s32.totalorder %s30, 1
          %s495 = scalar_select %p494, %s30, 1
          %s496 = scalar_lea.vmem %s6, %s495
        $region76: #{tpu_custom_call.1} parent=67 // pred_fallthru
          _
      $region68: #{tpu_custom_call.1} parent=5 // pred_fallthru
        _
    $region6: #{tpu_custom_call.1} parent=1 // loop_footer
      %s23 = sadd.s32 1, %s19
    $region7: #{tpu_custom_call.1} parent=1 // loop_footer_branch
      %18 = sbr.rel target = $region3
    $region8: #{tpu_custom_call.1} parent=1 // loop_exit
      _
    %497 = vsyncpa [#allocation4], 1
    %s498 = scalar_lea.sflag [#allocation4], 1
    %499 = vsyncpa %s498, 1
    %500 = vsyncpa [#allocation5], 1
    %s501 = scalar_lea.sflag [#allocation5], 1
    %502 = vsyncpa %s501, 1

</llo_original>
